<compile_context>
chip_gen: v5e
topology: v5e:2x2
jax: 0.10.0
libtpu: 0.0.40
codegen_flags: <defaults>
</compile_context>

<pallas_src>
import functools

import jax
import jax.numpy as jnp
from jax.experimental import pallas as pl
from jax.experimental.pallas import tpu as pltpu

BN_EPS = 1e-5
LANE = 128
MIB = 1024 * 1024


def _round_up(v, m):
    return (v + m - 1) // m * m


def _vmem_ceiling():
    """Physical VMEM minus headroom for compiler-internal scratch."""
    try:
        cap = int(pltpu.get_tpu_info().vmem_capacity_bytes)
    except Exception:
        cap = 64 * MIB
    return max(32 * MIB, cap - 16 * MIB)


def _clamp_vmem(bytes_needed, ceiling):
    return int(min(ceiling, max(32 * MIB, int(1.25 * bytes_needed))))


def _pick_inter_tile(inter_dim, max_tile=1024):
    i128 = _round_up(inter_dim, LANE)
    return i128 if i128 <= max_tile else max_tile


def _pick_class_tile(num_classes, inter_p, vmem_ceiling, max_tile=2048):
    """Largest 256-multiple tile that minimizes class-dim padding and keeps the
    double-buffered bf16 W2 tile within ~1/3 of scoped VMEM."""
    c128 = _round_up(num_classes, LANE)
    cols_budget = (vmem_ceiling // 3) // (2 * inter_p * 2)  # bf16, double-buffered
    cap = max(256, min(max_tile, (cols_budget // 256) * 256))
    if c128 <= cap:
        return c128
    best_tc, best_cp = 256, _round_up(num_classes, 256)
    tc = 256
    while tc <= cap:
        cp = _round_up(num_classes, tc)
        if cp <= best_cp:           # prefer larger tile at equal padding
            best_tc, best_cp = tc, cp
        tc += 256
    return best_tc


# ----------------------------------------------------------------------------
# Kernels
# ----------------------------------------------------------------------------
def _fc1_bn_kernel(x_ref, w1_ref, p_ref, fc1_ref, xn_ref, *, n_valid, n_pad):
    """Call A.  Grid axis 0 tiles the (padded) inter dimension.

    BN statistics are per-feature, so each inter tile is independent (the
    batch stays whole inside the tile -> exact train-mode statistics).
    """
    # fc1 = x @ W1^T + b1   (bf16 operands, f32 accumulate on the MXU)
    fc1 = jnp.dot(x_ref[...], w1_ref[...], preferred_element_type=jnp.float32)
    fc1 = fc1 + p_ref[0:1, :]                                # b1
    fc1_ref[...] = fc1.astype(fc1_ref.dtype)

    # BatchNorm1d (train mode): batch mean, biased batch variance, f32.
    if n_valid == n_pad:
        mean = jnp.mean(fc1, axis=0, keepdims=True)
        centered = fc1 - mean
        var = jnp.mean(centered * centered, axis=0, keepdims=True)
    else:
        # Mask padded batch rows so they never enter the statistics.
        row = jax.lax.broadcasted_iota(jnp.int32, (n_pad, 1), 0)
        rmask = (row < n_valid).astype(jnp.float32)
        inv_n = 1.0 / float(n_valid)
        mean = jnp.sum(fc1 * rmask, axis=0, keepdims=True) * inv_n
        centered = (fc1 - mean) * rmask
        var = jnp.sum(centered * centered, axis=0, keepdims=True) * inv_n

    inv_std = jax.lax.rsqrt(var + BN_EPS)                    # EUP slot, ~free
    # Fold the affine: xn = fc1*s + t with s = gamma*inv_std, t = beta - mean*s.
    s = p_ref[1:2, :] * inv_std
    t = p_ref[2:3, :] - mean * s
    xn_ref[...] = (fc1 * s + t).astype(xn_ref.dtype)


def _logits_kernel(xn_ref, w2_ref, out_ref):
    """Call B.  Grid axis 0 tiles the (padded) class dimension; xn is resident,
    W2^T tiles are streamed/pipelined."""
    out = jnp.dot(xn_ref[...], w2_ref[...], preferred_element_type=jnp.float32)
    out_ref[...] = out.astype(out_ref.dtype)


# ----------------------------------------------------------------------------
# Parameter preparation (done ONCE, outside the per-step forward path)
# ----------------------------------------------------------------------------
def prepare_bnneck_params(w1, b1, gamma, beta, w2, *,
                          max_class_tile=2048, max_inter_tile=1024):
    """Transpose / zero-pad / bf16-cast the weights once.

    w1: (inter, in), b1/gamma/beta: (inter,), w2: (num_classes, inter).
    """
    inter_dim, in_dim = w1.shape
    num_classes = w2.shape[0]

    in_p = _round_up(in_dim, LANE)
    ti = _pick_inter_tile(inter_dim, max_inter_tile)
    inter_p = _round_up(inter_dim, ti)

    vmem_ceiling = _vmem_ceiling()
    tc = _pick_class_tile(num_classes, inter_p, vmem_ceiling, max_class_tile)
    c_p = _round_up(num_classes, tc)

    w1_t = jnp.zeros((in_p, inter_p), jnp.float32)
    w1_t = w1_t.at[:in_dim, :inter_dim].set(jnp.transpose(w1).astype(jnp.float32))
    w1_t = w1_t.astype(jnp.bfloat16)

    w2_t = jnp.zeros((inter_p, c_p), jnp.float32)
    w2_t = w2_t.at[:inter_dim, :num_classes].set(
        jnp.transpose(w2).astype(jnp.float32))
    w2_t = w2_t.astype(jnp.bfloat16)

    # b1 / gamma / beta packed into a single (3, inter_p) f32 operand
    # (zero padding keeps padded feature lanes exactly 0 through BN).
    params = jnp.zeros((3, inter_p), jnp.float32)
    params = params.at[0, :inter_dim].set(b1.astype(jnp.float32))
    params = params.at[1, :inter_dim].set(gamma.astype(jnp.float32))
    params = params.at[2, :inter_dim].set(beta.astype(jnp.float32))

    dims = dict(in_dim=in_dim, inter_dim=inter_dim, num_classes=num_classes,
                in_p=in_p, inter_p=inter_p, c_p=c_p, ti=ti, tc=tc)
    return dict(w1_t=w1_t, w2_t=w2_t, params=params, dims=dims)


# ----------------------------------------------------------------------------
# Forward
# ----------------------------------------------------------------------------
@functools.partial(jax.jit,
                   static_argnames=("inter_dim", "num_classes", "ti", "tc"))
def _bnneck_forward_impl(x, w1_t, params, w2_t, *,
                         inter_dim, num_classes, ti, tc):
    n, in_dim = x.shape
    in_p, inter_p = w1_t.shape
    c_p = w2_t.shape[1]

    # Batch padded to a multiple of 16 (bf16 sublane packing); padded rows are
    # masked out of the BN statistics inside the kernel and stripped here.
    n_p = _round_up(max(n, 8), 16)
    x_pad = jnp.zeros((n_p, in_p), jnp.bfloat16).at[:n, :in_dim].set(
        x.astype(jnp.bfloat16))

    vmem_ceiling = _vmem_ceiling()

    # ---------------- Call A: fc1 + BatchNorm (grid over inter tiles) -------
    grid_a = (inter_p // ti,)
    bytes_a = (2 * n_p * in_p * 2        # x (bf16, resident)
               + 2 * in_p * ti * 2       # W1^T tile (bf16)
               + 2 * 8 * ti * 4          # packed b1/gamma/beta (sublane-padded)
               + 2 * n_p * ti * 4        # fc1 tile out (f32)
               + 2 * n_p * ti * 2)       # xn tile out (bf16)
    fc1_pad, xn = pl.pallas_call(
        functools.partial(_fc1_bn_kernel, n_valid=n, n_pad=n_p),
        out_shape=(
            jax.ShapeDtypeStruct((n_p, inter_p), jnp.float32),
            jax.ShapeDtypeStruct((n_p, inter_p), jnp.bfloat16),
        ),
        grid_spec=pltpu.PrefetchScalarGridSpec(
            num_scalar_prefetch=0,
            grid=grid_a,
            in_specs=[
                pl.BlockSpec((n_p, in_p), lambda i: (0, 0)),     # x (resident)
                pl.BlockSpec((in_p, ti), lambda i: (0, i)),      # W1^T tile
                pl.BlockSpec((3, ti), lambda i: (0, i)),         # b1/gamma/beta
            ],
            out_specs=(
                pl.BlockSpec((n_p, ti), lambda i: (0, i)),       # fc1 tile
                pl.BlockSpec((n_p, ti), lambda i: (0, i)),       # xn tile
            ),
        ),
        compiler_params=pltpu.CompilerParams(
            dimension_semantics=("parallel",),
            vmem_limit_bytes=_clamp_vmem(bytes_a, vmem_ceiling),
        ),
    )(x_pad, w1_t, params)

    # ---------------- Call B: logits = xn @ W2^T (grid over class tiles) ----
    grid_b = (c_p // tc,)
    bytes_b = (2 * n_p * inter_p * 2     # xn (bf16, resident)
               + 2 * inter_p * tc * 2    # W2^T tile (bf16, double-buffered)
               + 2 * n_p * tc * 4)       # logits tile out (f32)
    logits_pad = pl.pallas_call(
        _logits_kernel,
        out_shape=jax.ShapeDtypeStruct((n_p, c_p), jnp.float32),
        grid_spec=pltpu.PrefetchScalarGridSpec(
            num_scalar_prefetch=0,
            grid=grid_b,
            in_specs=[
                pl.BlockSpec((n_p, inter_p), lambda j: (0, 0)),  # xn (resident)
                pl.BlockSpec((inter_p, tc), lambda j: (0, j)),   # W2^T tile
            ],
            out_specs=pl.BlockSpec((n_p, tc), lambda j: (0, j)),
        ),
        compiler_params=pltpu.CompilerParams(
            dimension_semantics=("parallel",),   # class tiles are independent
            vmem_limit_bytes=_clamp_vmem(bytes_b, vmem_ceiling),
        ),
    )(xn, w2_t)

    # Strip padded rows/columns (padding is exact zero / masked).
    return fc1_pad[:n, :inter_dim], logits_pad[:n, :num_classes]


def bnneck_forward(x, prepared):
    d = prepared["dims"]
    return _bnneck_forward_impl(
        x, prepared["w1_t"], prepared["params"], prepared["w2_t"],
        inter_dim=d["inter_dim"], num_classes=d["num_classes"],
        ti=d["ti"], tc=d["tc"])


# ----------------------------------------------------------------------------
# References
# ----------------------------------------------------------------------------
def reference_forward_f32(x, w1, b1, gamma, beta, w2):
    """Pure-JAX f32 reference of the PyTorch forward (train-mode BN)."""
    fc1 = x @ w1.T + b1
    mean = jnp.mean(fc1, axis=0, keepdims=True)
    var = jnp.mean((fc1 - mean) ** 2, axis=0, keepdims=True)
    xn = (fc1 - mean) / jnp.sqrt(var + BN_EPS) * gamma + beta
    return fc1, xn @ w2.T


def reference_forward_bf16(x, w1, b1, gamma, beta, w2):
    """Reference with the same bf16-operand / f32-accumulate matmul recipe."""
    fc1 = jnp.dot(x.astype(jnp.bfloat16), w1.T.astype(jnp.bfloat16),
                  preferred_element_type=jnp.float32) + b1
    mean = jnp.mean(fc1, axis=0, keepdims=True)
    var = jnp.mean((fc1 - mean) ** 2, axis=0, keepdims=True)
    inv_std = jax.lax.rsqrt(var + BN_EPS)
    s = gamma * inv_std
    t = beta - mean * s
    xn = (fc1 * s + t).astype(jnp.bfloat16)
    logits = jnp.dot(xn, w2.T.astype(jnp.bfloat16),
                     preferred_element_type=jnp.float32)
    return fc1, logits


if __name__ == "__main__":
    # Small shapes consistent with the module: batch=8, in_dim=32,
    # inter_dim=64 (embedding), num_classes=16.
    N, IN_DIM, INTER_DIM, NUM_CLASSES = 8, 32, 64, 16

    key = jax.random.PRNGKey(0)
    kx, kw1, kb1, kw2 = jax.random.split(key, 4)

    x = jax.random.normal(kx, (N, IN_DIM), dtype=jnp.float32)
    w1 = jax.random.uniform(kw1, (INTER_DIM, IN_DIM), jnp.float32,
                            -1.0 / IN_DIM ** 0.5, 1.0 / IN_DIM ** 0.5)
    b1 = jax.random.uniform(kb1, (INTER_DIM,), jnp.float32,
                            -1.0 / IN_DIM ** 0.5, 1.0 / IN_DIM ** 0.5)
    gamma = jnp.ones((INTER_DIM,), jnp.float32)     # BatchNorm1d default init
    beta = jnp.zeros((INTER_DIM,), jnp.float32)
    w2 = jax.random.uniform(kw2, (NUM_CLASSES, INTER_DIM), jnp.float32,
                            -1.0 / INTER_DIM ** 0.5, 1.0 / INTER_DIM ** 0.5)

    prepared = prepare_bnneck_params(w1, b1, gamma, beta, w2)   # once
    fc1_out, logits = bnneck_forward(x, prepared)
    jax.block_until_ready((fc1_out, logits))

    assert fc1_out.shape == (N, INTER_DIM) and logits.shape == (N, NUM_CLASSES)

    # Tight check vs a reference using the same bf16-operand matmul recipe.
    fc1_m, logits_m = reference_forward_bf16(x, w1, b1, gamma, beta, w2)
    assert jnp.allclose(fc1_out, fc1_m, atol=2e-3, rtol=2e-3)
    assert jnp.allclose(logits, logits_m, atol=2e-3, rtol=2e-3)

    # Loose check vs the exact f32 PyTorch-equivalent math (bf16 rounding).
    fc1_ref, logits_ref = reference_forward_f32(x, w1, b1, gamma, beta, w2)
    assert jnp.allclose(fc1_out, fc1_ref, atol=8e-2, rtol=8e-2)
    assert jnp.allclose(logits, logits_ref, atol=8e-2, rtol=8e-2)

    print("KERNEL_OK")
</pallas_src>

<mosaic_0001>
module attributes {stable_mosaic.version = 11 : i64} {
  func.func @_fc1_bn_kernel(%arg0: i32, %arg1: memref<16x128xbf16, #tpu.memory_space<vmem>>, %arg2: memref<128x128xbf16, #tpu.memory_space<vmem>>, %arg3: memref<3x128xf32, #tpu.memory_space<vmem>>, %arg4: memref<16x128xf32, #tpu.memory_space<vmem>>, %arg5: memref<16x128xbf16, #tpu.memory_space<vmem>>) attributes {dimension_semantics = [#tpu.dimension_semantics<parallel>], iteration_bounds = array<i64: 1>, scalar_prefetch = 0 : i64, scratch_operands = 0 : i64, tpu.core_type = #tpu.core_type<tc>, window_params = [{pipeline_mode = #tpu.pipeline_mode<synchronous>, transform_indices = @transform_0, window_bounds = array<i64: 16, 128>}, {transform_indices = @transform_1, window_bounds = array<i64: 128, 128>}, {transform_indices = @transform_2, window_bounds = array<i64: 3, 128>}, {transform_indices = @transform_3, window_bounds = array<i64: 16, 128>}, {transform_indices = @transform_4, window_bounds = array<i64: 16, 128>}]} {
    %c0 = arith.constant 0 : index
    %c0_0 = arith.constant 0 : index
    %0 = vector.load %arg1[%c0, %c0_0] : memref<16x128xbf16, #tpu.memory_space<vmem>>, vector<16x128xbf16>
    %c0_1 = arith.constant 0 : index
    %c0_2 = arith.constant 0 : index
    %1 = vector.load %arg2[%c0_1, %c0_2] : memref<128x128xbf16, #tpu.memory_space<vmem>>, vector<128x128xbf16>
    %cst = arith.constant dense<0.000000e+00> : vector<16x128xf32>
    %2 = tpu.matmul %0, %1, %cst {dimension_numbers = #tpu.dot_dimension_numbers<[1], [0], [0], [1], [0, 0, 1, 1], [], []>} : vector<16x128xbf16>, vector<128x128xbf16>, vector<16x128xf32> -> vector<16x128xf32>
    %c0_3 = arith.constant 0 : index
    %c0_4 = arith.constant 0 : index
    %3 = vector.load %arg3[%c0_3, %c0_4] : memref<3x128xf32, #tpu.memory_space<vmem>>, vector<1x128xf32>
    %4 = vector.broadcast %3 : vector<1x128xf32> to vector<16x128xf32>
    %5 = arith.addf %2, %4 : vector<16x128xf32>
    %c0_5 = arith.constant 0 : index
    %c0_6 = arith.constant 0 : index
    %6 = vector.load %arg4[%c0_5, %c0_6] : memref<16x128xf32, #tpu.memory_space<vmem>>, vector<16x128xf32>
    tpu.vector_store %arg4[%c0_5, %c0_6], %5 {strides = array<i32>} : memref<16x128xf32, #tpu.memory_space<vmem>>, vector<16x128xf32>,
    %7 = tpu.iota {dimensions = array<i32: 0>} : vector<16x1xi32>
    %c8_i32 = arith.constant 8 : i32
    %8 = vector.broadcast %c8_i32 : i32 to vector<16x1xi32>
    %9 = arith.cmpi slt, %7, %8 : vector<16x1xi32>
    %10 = arith.extui %9 : vector<16x1xi1> to vector<16x1xi32>
    %11 = arith.sitofp %10 : vector<16x1xi32> to vector<16x1xf32>
    %12 = vector.broadcast %11 : vector<16x1xf32> to vector<16x128xf32>
    %13 = arith.mulf %5, %12 : vector<16x128xf32>
    %cst_7 = arith.constant dense<0.000000e+00> : vector<128xf32>
    %14 = vector.multi_reduction <add>, %13, %cst_7 [0] : vector<16x128xf32> to vector<128xf32>
    %15 = vector.shape_cast %14 : vector<128xf32> to vector<1x128xf32>
    %cst_8 = arith.constant 1.250000e-01 : f32
    %16 = vector.broadcast %cst_8 : f32 to vector<1x128xf32>
    %17 = arith.mulf %15, %16 : vector<1x128xf32>
    %18 = vector.broadcast %17 : vector<1x128xf32> to vector<16x128xf32>
    %19 = arith.subf %5, %18 : vector<16x128xf32>
    %20 = vector.broadcast %11 : vector<16x1xf32> to vector<16x128xf32>
    %21 = arith.mulf %19, %20 : vector<16x128xf32>
    %22 = arith.mulf %21, %21 : vector<16x128xf32>
    %cst_9 = arith.constant dense<0.000000e+00> : vector<128xf32>
    %23 = vector.multi_reduction <add>, %22, %cst_9 [0] : vector<16x128xf32> to vector<128xf32>
    %24 = vector.shape_cast %23 : vector<128xf32> to vector<1x128xf32>
    %cst_10 = arith.constant 1.250000e-01 : f32
    %25 = vector.broadcast %cst_10 : f32 to vector<1x128xf32>
    %26 = arith.mulf %24, %25 : vector<1x128xf32>
    %cst_11 = arith.constant 9.99999974E-6 : f32
    %27 = vector.broadcast %cst_11 : f32 to vector<1x128xf32>
    %28 = arith.addf %26, %27 : vector<1x128xf32>
    %29 = math.rsqrt %28 : vector<1x128xf32>
    %c1 = arith.constant 1 : index
    %c0_12 = arith.constant 0 : index
    %30 = vector.load %arg3[%c1, %c0_12] : memref<3x128xf32, #tpu.memory_space<vmem>>, vector<1x128xf32>
    %31 = arith.mulf %30, %29 : vector<1x128xf32>
    %c2 = arith.constant 2 : index
    %c0_13 = arith.constant 0 : index
    %32 = vector.load %arg3[%c2, %c0_13] : memref<3x128xf32, #tpu.memory_space<vmem>>, vector<1x128xf32>
    %33 = arith.mulf %17, %31 : vector<1x128xf32>
    %34 = arith.subf %32, %33 : vector<1x128xf32>
    %35 = vector.broadcast %31 : vector<1x128xf32> to vector<16x128xf32>
    %36 = arith.mulf %5, %35 : vector<16x128xf32>
    %37 = vector.broadcast %34 : vector<1x128xf32> to vector<16x128xf32>
    %38 = arith.addf %36, %37 : vector<16x128xf32>
    %39 = arith.truncf %38 : vector<16x128xf32> to vector<16x128xbf16>
    %c0_14 = arith.constant 0 : index
    %c0_15 = arith.constant 0 : index
    %40 = vector.load %arg5[%c0_14, %c0_15] : memref<16x128xbf16, #tpu.memory_space<vmem>>, vector<16x128xbf16>
    tpu.vector_store %arg5[%c0_14, %c0_15], %39 {strides = array<i32>} : memref<16x128xbf16, #tpu.memory_space<vmem>>, vector<16x128xbf16>,
    return
  }
  func.func @transform_0(%arg0: i32) -> (i32, i32) {
    %c0_i32 = arith.constant 0 : i32
    %c0_i32_0 = arith.constant 0 : i32
    %c0_i32_1 = arith.constant 0 : i32
    return %c0_i32, %c0_i32_0 : i32, i32
  }
  func.func @transform_1(%arg0: i32) -> (i32, i32) {
    %c0_i32 = arith.constant 0 : i32
    %c0_i32_0 = arith.constant 0 : i32
    return %c0_i32, %arg0 : i32, i32
  }
  func.func @transform_2(%arg0: i32) -> (i32, i32) {
    %c0_i32 = arith.constant 0 : i32
    %c0_i32_0 = arith.constant 0 : i32
    return %c0_i32, %arg0 : i32, i32
  }
  func.func @transform_3(%arg0: i32) -> (i32, i32) {
    %c0_i32 = arith.constant 0 : i32
    %c0_i32_0 = arith.constant 0 : i32
    return %c0_i32, %arg0 : i32, i32
  }
  func.func @transform_4(%arg0: i32) -> (i32, i32) {
    %c0_i32 = arith.constant 0 : i32
    %c0_i32_0 = arith.constant 0 : i32
    return %c0_i32, %arg0 : i32, i32
  }
}

module attributes {stable_mosaic.version = 11 : i64} {
  func.func @_logits_kernel(%arg0: i32, %arg1: memref<16x128xbf16, #tpu.memory_space<vmem>>, %arg2: memref<128x128xbf16, #tpu.memory_space<vmem>>, %arg3: memref<16x128xf32, #tpu.memory_space<vmem>>) attributes {dimension_semantics = [#tpu.dimension_semantics<parallel>], iteration_bounds = array<i64: 1>, scalar_prefetch = 0 : i64, scratch_operands = 0 : i64, tpu.core_type = #tpu.core_type<tc>, window_params = [{pipeline_mode = #tpu.pipeline_mode<synchronous>, transform_indices = @transform_0, window_bounds = array<i64: 16, 128>}, {transform_indices = @transform_1, window_bounds = array<i64: 128, 128>}, {transform_indices = @transform_2, window_bounds = array<i64: 16, 128>}]} {
    %c0 = arith.constant 0 : index
    %c0_0 = arith.constant 0 : index
    %0 = vector.load %arg1[%c0, %c0_0] : memref<16x128xbf16, #tpu.memory_space<vmem>>, vector<16x128xbf16>
    %c0_1 = arith.constant 0 : index
    %c0_2 = arith.constant 0 : index
    %1 = vector.load %arg2[%c0_1, %c0_2] : memref<128x128xbf16, #tpu.memory_space<vmem>>, vector<128x128xbf16>
    %cst = arith.constant dense<0.000000e+00> : vector<16x128xf32>
    %2 = tpu.matmul %0, %1, %cst {dimension_numbers = #tpu.dot_dimension_numbers<[1], [0], [0], [1], [0, 0, 1, 1], [], []>} : vector<16x128xbf16>, vector<128x128xbf16>, vector<16x128xf32> -> vector<16x128xf32>
    %c0_3 = arith.constant 0 : index
    %c0_4 = arith.constant 0 : index
    %3 = vector.load %arg3[%c0_3, %c0_4] : memref<16x128xf32, #tpu.memory_space<vmem>>, vector<16x128xf32>
    tpu.vector_store %arg3[%c0_3, %c0_4], %2 {strides = array<i32>} : memref<16x128xf32, #tpu.memory_space<vmem>>, vector<16x128xf32>,
    return
  }
  func.func @transform_0(%arg0: i32) -> (i32, i32) {
    %c0_i32 = arith.constant 0 : i32
    %c0_i32_0 = arith.constant 0 : i32
    %c0_i32_1 = arith.constant 0 : i32
    return %c0_i32, %c0_i32_0 : i32, i32
  }
  func.func @transform_1(%arg0: i32) -> (i32, i32) {
    %c0_i32 = arith.constant 0 : i32
    %c0_i32_0 = arith.constant 0 : i32
    return %c0_i32, %arg0 : i32, i32
  }
  func.func @transform_2(%arg0: i32) -> (i32, i32) {
    %c0_i32 = arith.constant 0 : i32
    %c0_i32_0 = arith.constant 0 : i32
    return %c0_i32, %arg0 : i32, i32
  }
}

</mosaic_0001>

<llo_original>
// kernel: _bnneck_forward_impl.2
$region0: #{_bnneck_forward_impl.2}
  #allocation0 [shape = 'u32[]', space=smem, size = 0x4, offset = 0x4, fixed_abs, tag = 'smem constant byte address 0x4 - core index']
  #allocation1 [shape = 'u32[72,128]{1,0:T(1,128)}', space=vmem, size = 0x9000, scoped, tag = 'internal scratch']
  %s0 = inlined_call_operand.vmem [shape: bf16[16,128], index: 0, kind: input, shape index: {}]
  %s1 = inlined_call_operand.hbm [shape: bf16[128,128], index: 1, kind: input, shape index: {}]
  %s2 = inlined_call_operand.vmem [shape: f32[3,128], index: 2, kind: input, shape index: {}]
  %s3 = inlined_call_operand.vmem [shape: f32[16,128], index: 3, kind: output, shape index: {0}]
  %s4 = inlined_call_operand.vmem [shape: bf16[16,128], index: 4, kind: output, shape index: {1}]
  %5 = xla_tuple %s3, %s4
  %s6 = sld [smem:[#allocation0]]
  $region34: #{_bnneck_forward_impl.2} parent=0
    _
  %s8 = ssub.s32 1, %s6
  %s9 = scalar_select 0, %s8, %s6
  $region1: #{_bnneck_forward_impl.2} parent=0
    #allocation2 [shape = 'u8[32768]{0}', space=vmem, size = 0x8000, scoped, tag = 'input window, operand 1, single buffered']
    #allocation3 [shape = 's32[1]{0}', space=sflag, size = 0x4, scoped, tag = 'scoped memory for _bnneck_forward_impl.2']
    %10 = vsyncpa [#allocation3], 0
    // Predicated region
    $region2: #{_bnneck_forward_impl.2} parent=1 // pred_check
      _
    $region3: #{_bnneck_forward_impl.2} parent=1 // pred_check_branch
      %12 = sbr.rel (0) target = $region5
    $region4: #{_bnneck_forward_impl.2} parent=1 // pred_region
      _
    $region5: #{_bnneck_forward_impl.2} parent=1 // pred_fallthru
      _
    // Predicated region
    $region6: #{_bnneck_forward_impl.2} parent=1 // pred_check
      _
    $region7: #{_bnneck_forward_impl.2} parent=1 // pred_check_branch
      %14 = sbr.rel (0) target = $region9
    $region8: #{_bnneck_forward_impl.2} parent=1 // pred_region
      %16 = vsyncadd [#allocation3], 0
      %s17 = sshll.u32 %s1, 4
      %s18 = int_to_ptr.hbm [resolvable:$true] %s17
      %s19 = sshll.u32 [#allocation2], 4
      %s20 = int_to_ptr.vmem [resolvable:$true] %s19
      %25 = dma.hbm_to_vmem [thread:$0]  %s18, 1024, %s20, [#allocation3], 64, 64, 4
    $region9: #{_bnneck_forward_impl.2} parent=1 // pred_fallthru
      _
    // Predicated region
    $region10: #{_bnneck_forward_impl.2} parent=1 // pred_check
      _
    $region11: #{_bnneck_forward_impl.2} parent=1 // pred_check_branch
      %27 = sbr.rel (0) target = $region13
    $region12: #{_bnneck_forward_impl.2} parent=1 // pred_region
      _
    $region13: #{_bnneck_forward_impl.2} parent=1 // pred_fallthru
      _
    // Predicated region
    $region14: #{_bnneck_forward_impl.2} parent=1 // pred_check
      _
    $region15: #{_bnneck_forward_impl.2} parent=1 // pred_check_branch
      %29 = sbr.rel (0) target = $region17
    $region16: #{_bnneck_forward_impl.2} parent=1 // pred_region
      %31 = dma.done [#allocation3], 1024
    $region17: #{_bnneck_forward_impl.2} parent=1 // pred_fallthru
      _
    %v32 = vld [vmem:[%s0] sm:$0xf]
    %v33 = vld [vmem:[%s0 + $0x4] sm:$0xf]
    %v34 = vld [vmem:[#allocation2] sm:$0xf]
    %v35 = vld [vmem:[#allocation2 + $0x4] sm:$0xf]
    %v36 = vld [vmem:[#allocation2 + $0x8] sm:$0xf]
    %v37 = vld [vmem:[#allocation2 + $0xc] sm:$0xf]
    %v38 = vld [vmem:[#allocation2 + $0x10] sm:$0xf]
    %v39 = vld [vmem:[#allocation2 + $0x14] sm:$0xf]
    %v40 = vld [vmem:[#allocation2 + $0x18] sm:$0xf]
    %v41 = vld [vmem:[#allocation2 + $0x1c] sm:$0xf]
    %v42 = vld [vmem:[#allocation2 + $0x20] sm:$0xf]
    %v43 = vld [vmem:[#allocation2 + $0x24] sm:$0xf]
    %v44 = vld [vmem:[#allocation2 + $0x28] sm:$0xf]
    %v45 = vld [vmem:[#allocation2 + $0x2c] sm:$0xf]
    %v46 = vld [vmem:[#allocation2 + $0x30] sm:$0xf]
    %v47 = vld [vmem:[#allocation2 + $0x34] sm:$0xf]
    %v48 = vld [vmem:[#allocation2 + $0x38] sm:$0xf]
    %v49 = vld [vmem:[#allocation2 + $0x3c] sm:$0xf]
    %v50 = vld [vmem:[%s2] sm:$0x1]
    %v51 = vperm.slane %v50, 0
    %v54 = vunpack.c.l.b16 %v32
    %v55 = vunpack.c.l.b16 %v33
    %v56 = vpack.c.b16 %v55, %v54
    %v74 = vunpack.c.l.b16 %v34
    %v75 = vunpack.c.l.b16 %v35
    %v76 = vunpack.c.l.b16 %v36
    %v77 = vunpack.c.l.b16 %v37
    %v78 = vunpack.c.l.b16 %v38
    %v79 = vunpack.c.l.b16 %v39
    %v80 = vunpack.c.l.b16 %v40
    %v81 = vunpack.c.l.b16 %v41
    %v82 = vunpack.c.l.b16 %v42
    %v83 = vunpack.c.l.b16 %v43
    %v84 = vunpack.c.l.b16 %v44
    %v85 = vunpack.c.l.b16 %v45
    %v86 = vunpack.c.l.b16 %v46
    %v87 = vunpack.c.l.b16 %v47
    %v88 = vunpack.c.l.b16 %v48
    %v89 = vunpack.c.l.b16 %v49
    %v90 = vpack.c.b16 %v75, %v74
    %v91 = vpack.c.b16 %v77, %v76
    %v92 = vpack.c.b16 %v79, %v78
    %v93 = vpack.c.b16 %v81, %v80
    %v94 = vpack.c.b16 %v83, %v82
    %v95 = vpack.c.b16 %v85, %v84
    %v96 = vpack.c.b16 %v87, %v86
    %v97 = vpack.c.b16 %v89, %v88
    %106 = vmatpush.bf16.msra.mxu0 %v97
    %107 = vmatpush.bf16.msra.mxu0 %v96
    %108 = vmatpush.bf16.msra.mxu0 %v95
    %109 = vmatpush.bf16.msra.mxu0 %v94
    %110 = vmatpush.bf16.msra.mxu0 %v93
    %111 = vmatpush.bf16.msra.mxu0 %v92
    %112 = vmatpush.bf16.msra.mxu0 %v91
    %113 = vmatpush.bf16.msra.mxu0 %v90
    %114 = vmatmul.bf16.gmra.mxu0 %v56
    %v115 = vpop.f32.mrf.mxu0
    %v116 = vadd.f32 %v51, %v115
    %v117 = vpop.f32.mrf.mxu0
    %v118 = vadd.f32 %v51, %v117
    %119 = vdwg.mxu0
    %120 = vst [vmem:[%s3] sm:$0xff] %v116
    %121 = vst [vmem:[%s3 + $0x8] sm:$0xff] %v118
    %v122 = vlaneseq
    %v123 = vshrl.u32 %v122, 7
    %v124 = vadd.s32 %v123, 8
    %vm125 = vcmp.lt.s32.totalorder %v123, 8
    %vm126 = vcmp.lt.s32.totalorder %v124, 8
    %v127 = vsel %vm125, 1, 0
    %v128 = vsel %vm126, 1, 0
    %v129 = vcvt.s32.f32 %v127
    %v130 = vcvt.s32.f32 %v128
    %v131 = vmul.f32 %v116, %v129
    %v132 = vmul.f32 %v118, %v130
    %v133 = vadd.f32 %v131, %v132
    %v134 = vrot.slane %v133, 4
    %v135 = vadd.f32 %v133, %v134
    %v136 = vrot.slane %v135, 2
    %v137 = vadd.f32 %v135, %v136
    %v138 = vrot.slane %v137, 1
    %v139 = vadd.f32 %v137, %v138
    %v140 = vmul.f32 %v139, 0.125
    %v141 = vsub.f32 %v116, %v140
    %v142 = vsub.f32 %v118, %v140
    %v143 = vmul.f32 %v141, %v129
    %v144 = vmul.f32 %v142, %v130
    %v145 = vmul.f32 %v143, %v143
    %v146 = vmul.f32 %v144, %v144
    %v147 = vadd.f32 %v145, %v146
    %v148 = vrot.slane %v147, 4
    %v149 = vadd.f32 %v147, %v148
    %v150 = vrot.slane %v149, 2
    %v151 = vadd.f32 %v149, %v150
    %v152 = vrot.slane %v151, 1
    %v153 = vadd.f32 %v151, %v152
    %v154 = vmul.f32 %v153, 0.125
    %v155 = vadd.f32 %v154, 1e-05
    %v156 = vrsqrt.pop %v155
    %v157 = vmul.f32 %v156, %v155
    %v158 = vmul.f32 %v157, %v156
    %v159 = vmul.f32 0.5, %v158
    %v160 = vsub.f32 1.5, %v159
    %v161 = vmul.f32 %v156, %v160
    %vm162 = vweird.f32 %v155
    %vm163 = vweird.f32 %v156
    %vm164 = vmor %vm162, %vm163
    %v165 = vsel %vm164, %v156, %v161
    %v166 = vld [vmem:[%s2 + $0x1] sm:$0x1]
    %v167 = vmul.f32 %v166, %v165
    %v168 = vld [vmem:[%s2 + $0x2] sm:$0x1]
    %v169 = vmul.f32 %v140, %v167
    %v170 = vsub.f32 %v168, %v169
    %v171 = vperm.slane %v167, 0
    %v172 = vmul.f32 %v116, %v171
    %v173 = vmul.f32 %v118, %v171
    %v174 = vperm.slane %v170, 0
    %v175 = vadd.f32 %v172, %v174
    %v176 = vadd.f32 %v173, %v174
    %v177 = vpack.c.bf16 %v175, %v175
    %v178 = vpack.c.bf16 %v176, %v176
    %179 = vst [vmem:[%s4] sm:$0xf] %v177
    %180 = vst [vmem:[%s4 + $0x4] sm:$0xf] %v178
    // Predicated region
    $region18: #{_bnneck_forward_impl.2} parent=1 // pred_check
      _
    $region19: #{_bnneck_forward_impl.2} parent=1 // pred_check_branch
      %182 = sbr.rel (0) target = $region21
    $region20: #{_bnneck_forward_impl.2} parent=1 // pred_region
      _
    $region21: #{_bnneck_forward_impl.2} parent=1 // pred_fallthru
      _
    // Predicated region
    $region22: #{_bnneck_forward_impl.2} parent=1 // pred_check
      _
    $region23: #{_bnneck_forward_impl.2} parent=1 // pred_check_branch
      %184 = sbr.rel (0) target = $region25
    $region24: #{_bnneck_forward_impl.2} parent=1 // pred_region
      _
    $region25: #{_bnneck_forward_impl.2} parent=1 // pred_fallthru
      _
    // Predicated region
    $region26: #{_bnneck_forward_impl.2} parent=1 // pred_check
      _
    $region27: #{_bnneck_forward_impl.2} parent=1 // pred_check_branch
      %186 = sbr.rel (0) target = $region29
    $region28: #{_bnneck_forward_impl.2} parent=1 // pred_region
      _
    $region29: #{_bnneck_forward_impl.2} parent=1 // pred_fallthru
      _
    // Predicated region
    $region30: #{_bnneck_forward_impl.2} parent=1 // pred_check
      _
    $region31: #{_bnneck_forward_impl.2} parent=1 // pred_check_branch
      %188 = sbr.rel (0) target = $region33
    $region32: #{_bnneck_forward_impl.2} parent=1 // pred_region
      _
    $region33: #{_bnneck_forward_impl.2} parent=1 // pred_fallthru
      _
    %189 = vsyncpa [#allocation3], 1

// kernel: _bnneck_forward_impl.3
$region0: #{_bnneck_forward_impl.3}
  #allocation0 [shape = 'u32[]', space=smem, size = 0x4, offset = 0x4, fixed_abs, tag = 'smem constant byte address 0x4 - core index']
  #allocation1 [shape = 'u32[72,128]{1,0:T(1,128)}', space=vmem, size = 0x9000, scoped, tag = 'internal scratch']
  %s0 = inlined_call_operand.vmem [shape: bf16[16,128], index: 0, kind: input, shape index: {}]
  %s1 = inlined_call_operand.hbm [shape: bf16[128,128], index: 1, kind: input, shape index: {}]
  %s2 = inlined_call_operand.vmem [shape: f32[16,128], index: 2, kind: output, shape index: {}]
  %s3 = sld [smem:[#allocation0]]
  $region22: #{_bnneck_forward_impl.3} parent=0
    _
  %s5 = ssub.s32 1, %s3
  %s6 = scalar_select 0, %s5, %s3
  $region1: #{_bnneck_forward_impl.3} parent=0
    #allocation2 [shape = 'u8[32768]{0}', space=vmem, size = 0x8000, scoped, tag = 'input window, operand 1, single buffered']
    #allocation3 [shape = 's32[1]{0}', space=sflag, size = 0x4, scoped, tag = 'scoped memory for _bnneck_forward_impl.3']
    %7 = vsyncpa [#allocation3], 0
    // Predicated region
    $region2: #{_bnneck_forward_impl.3} parent=1 // pred_check
      _
    $region3: #{_bnneck_forward_impl.3} parent=1 // pred_check_branch
      %9 = sbr.rel (0) target = $region5
    $region4: #{_bnneck_forward_impl.3} parent=1 // pred_region
      _
    $region5: #{_bnneck_forward_impl.3} parent=1 // pred_fallthru
      _
    // Predicated region
    $region6: #{_bnneck_forward_impl.3} parent=1 // pred_check
      _
    $region7: #{_bnneck_forward_impl.3} parent=1 // pred_check_branch
      %11 = sbr.rel (0) target = $region9
    $region8: #{_bnneck_forward_impl.3} parent=1 // pred_region
      %13 = vsyncadd [#allocation3], 0
      %s14 = sshll.u32 %s1, 4
      %s15 = int_to_ptr.hbm [resolvable:$true] %s14
      %s16 = sshll.u32 [#allocation2], 4
      %s17 = int_to_ptr.vmem [resolvable:$true] %s16
      %22 = dma.hbm_to_vmem [thread:$0]  %s15, 1024, %s17, [#allocation3], 64, 64, 4
    $region9: #{_bnneck_forward_impl.3} parent=1 // pred_fallthru
      _
    // Predicated region
    $region10: #{_bnneck_forward_impl.3} parent=1 // pred_check
      _
    $region11: #{_bnneck_forward_impl.3} parent=1 // pred_check_branch
      %24 = sbr.rel (0) target = $region13
    $region12: #{_bnneck_forward_impl.3} parent=1 // pred_region
      %26 = dma.done [#allocation3], 1024
    $region13: #{_bnneck_forward_impl.3} parent=1 // pred_fallthru
      _
    %v27 = vld [vmem:[%s0] sm:$0xf]
    %v28 = vld [vmem:[%s0 + $0x4] sm:$0xf]
    %v29 = vld [vmem:[#allocation2] sm:$0xf]
    %v30 = vld [vmem:[#allocation2 + $0x4] sm:$0xf]
    %v31 = vld [vmem:[#allocation2 + $0x8] sm:$0xf]
    %v32 = vld [vmem:[#allocation2 + $0xc] sm:$0xf]
    %v33 = vld [vmem:[#allocation2 + $0x10] sm:$0xf]
    %v34 = vld [vmem:[#allocation2 + $0x14] sm:$0xf]
    %v35 = vld [vmem:[#allocation2 + $0x18] sm:$0xf]
    %v36 = vld [vmem:[#allocation2 + $0x1c] sm:$0xf]
    %v37 = vld [vmem:[#allocation2 + $0x20] sm:$0xf]
    %v38 = vld [vmem:[#allocation2 + $0x24] sm:$0xf]
    %v39 = vld [vmem:[#allocation2 + $0x28] sm:$0xf]
    %v40 = vld [vmem:[#allocation2 + $0x2c] sm:$0xf]
    %v41 = vld [vmem:[#allocation2 + $0x30] sm:$0xf]
    %v42 = vld [vmem:[#allocation2 + $0x34] sm:$0xf]
    %v43 = vld [vmem:[#allocation2 + $0x38] sm:$0xf]
    %v44 = vld [vmem:[#allocation2 + $0x3c] sm:$0xf]
    %v47 = vunpack.c.l.b16 %v27
    %v48 = vunpack.c.l.b16 %v28
    %v49 = vpack.c.b16 %v48, %v47
    %v67 = vunpack.c.l.b16 %v29
    %v68 = vunpack.c.l.b16 %v30
    %v69 = vunpack.c.l.b16 %v31
    %v70 = vunpack.c.l.b16 %v32
    %v71 = vunpack.c.l.b16 %v33
    %v72 = vunpack.c.l.b16 %v34
    %v73 = vunpack.c.l.b16 %v35
    %v74 = vunpack.c.l.b16 %v36
    %v75 = vunpack.c.l.b16 %v37
    %v76 = vunpack.c.l.b16 %v38
    %v77 = vunpack.c.l.b16 %v39
    %v78 = vunpack.c.l.b16 %v40
    %v79 = vunpack.c.l.b16 %v41
    %v80 = vunpack.c.l.b16 %v42
    %v81 = vunpack.c.l.b16 %v43
    %v82 = vunpack.c.l.b16 %v44
    %v83 = vpack.c.b16 %v68, %v67
    %v84 = vpack.c.b16 %v70, %v69
    %v85 = vpack.c.b16 %v72, %v71
    %v86 = vpack.c.b16 %v74, %v73
    %v87 = vpack.c.b16 %v76, %v75
    %v88 = vpack.c.b16 %v78, %v77
    %v89 = vpack.c.b16 %v80, %v79
    %v90 = vpack.c.b16 %v82, %v81
    %99 = vmatpush.bf16.msra.mxu0 %v90
    %100 = vmatpush.bf16.msra.mxu0 %v89
    %101 = vmatpush.bf16.msra.mxu0 %v88
    %102 = vmatpush.bf16.msra.mxu0 %v87
    %103 = vmatpush.bf16.msra.mxu0 %v86
    %104 = vmatpush.bf16.msra.mxu0 %v85
    %105 = vmatpush.bf16.msra.mxu0 %v84
    %106 = vmatpush.bf16.msra.mxu0 %v83
    %107 = vmatmul.bf16.gmra.mxu0 %v49
    %v108 = vpop.f32.mrf.mxu0
    %v109 = vadd.f32 0.0, %v108
    %v110 = vpop.f32.mrf.mxu0
    %v111 = vadd.f32 0.0, %v110
    %112 = vdwg.mxu0
    %113 = vst [vmem:[%s2] sm:$0xff] %v109
    %114 = vst [vmem:[%s2 + $0x8] sm:$0xff] %v111
    // Predicated region
    $region14: #{_bnneck_forward_impl.3} parent=1 // pred_check
      _
    $region15: #{_bnneck_forward_impl.3} parent=1 // pred_check_branch
      %116 = sbr.rel (0) target = $region17
    $region16: #{_bnneck_forward_impl.3} parent=1 // pred_region
      _
    $region17: #{_bnneck_forward_impl.3} parent=1 // pred_fallthru
      _
    // Predicated region
    $region18: #{_bnneck_forward_impl.3} parent=1 // pred_check
      _
    $region19: #{_bnneck_forward_impl.3} parent=1 // pred_check_branch
      %118 = sbr.rel (0) target = $region21
    $region20: #{_bnneck_forward_impl.3} parent=1 // pred_region
      _
    $region21: #{_bnneck_forward_impl.3} parent=1 // pred_fallthru
      _
    %119 = vsyncpa [#allocation3], 1

</llo_original>
